<compile_context>
chip_gen: v7x
topology: tpu7x:2x2x1
jax: 0.10.0
libtpu: 0.0.40
codegen_flags: <defaults>
</compile_context>

<pallas_src>
import functools

import jax
import jax.numpy as jnp
from jax import lax
from jax.experimental import pallas as pl
from jax.experimental.pallas import tpu as pltpu

_VMEM_LIMIT_BYTES = 48 * 1024 * 1024   # > default scoped limit on all gens,
                                       # < physical VMEM on v5e/v6e/v7x.


# ----------------------------- Pallas kernels ------------------------------ #

def _qkv_kernel(x_ref, w_ref, o_ref):
    # x: (tq, bsz, d_model) f32 (original layout), w: (3H, d_model) bf16
    # o: (bsz, tq, 3H) bf16  -- the (q,b)->(b,q) reorder happens here (in VMEM
    # + via the output index map), never as a separate HBM transpose.
    bsz = x_ref.shape[1]
    wt = w_ref[...]
    for b in range(bsz):                      # static; bsz is small
        xb = x_ref[:, b, :].astype(wt.dtype)  # strided in-VMEM batch slice
        o_ref[b, :, :] = lax.dot_general(
            xb, wt,
            dimension_numbers=(((1,), (1,)), ((), ())),
            preferred_element_type=jnp.float32).astype(o_ref.dtype)


def _roll_left(x, t):
    # Static lane rotation by t (concat of two static lane slices).
    if t == 0:
        return x
    return jnp.concatenate([x[:, t:], x[:, :t]], axis=1)


def _attn_kernel(wh_ref, remb_ref, rwb_ref, rbias_ref, bias_ref, out_ref):
    # One batch element, all heads.
    #   wh_ref   : (qlen, 3H)         bf16  (q columns pre-scaled by 1/sqrt(dh))
    #   remb_ref : (n_head, klen, dh) bf16
    #   rwb_ref  : (n_head, dh)       bf16  (pre-scaled)
    #   rbias_ref: (n_head, klen)     f32   (pre-scaled)
    #   bias_ref : (qlen, klen)       bf16  additive mask (0 / -1e30)
    #   out_ref  : (qlen, H)          bf16
    n_head, klen, d_head = remb_ref.shape
    H = n_head * d_head
    qlen = wh_ref.shape[0]
    f32 = jnp.float32

    wh = wh_ref[...]
    rwb_all = rwb_ref[...]
    rb_all = rbias_ref[...]
    bias = bias_ref[...].astype(f32)

    # Exact torch _rel_shift (klen == qlen, no mems):
    #   out[i, j] = E[i, (klen-1-i) + j],  E[i] = [bd_pre[i] | 0 | bd_pre[i+1]]
    # The per-row left shift by (klen-1-i) is decomposed into log2(klen)
    # static lane rotations, each selected per row with a (Q,1) mask.
    nbits = (klen - 1).bit_length()
    row = lax.broadcasted_iota(jnp.int32, (qlen, 1), 0)
    shift_amt = (klen - 1) - row                                   # (qlen, 1)
    sel_masks = [((shift_amt >> b) & 1) == 1 for b in range(nbits)]
    zero_col = jnp.zeros((qlen, 1), f32)

    def rel_shift(bd_pre):
        if qlen > 1:
            nxt = jnp.concatenate(
                [bd_pre[1:, :], jnp.zeros((1, klen), f32)], axis=0)
        else:
            nxt = jnp.zeros((qlen, klen), f32)
        e = jnp.concatenate([bd_pre, zero_col, nxt], axis=1)   # (qlen, 2K+1)
        for b in range(nbits):
            e = jnp.where(sel_masks[b], _roll_left(e, 1 << b), e)
        return e[:, :klen]

    for n in range(n_head):               # static unroll over heads
        q = wh[:, n * d_head:(n + 1) * d_head]                   # (qlen, dh)
        k = wh[:, H + n * d_head:H + (n + 1) * d_head]           # (klen, dh)
        v = wh[:, 2 * H + n * d_head:2 * H + (n + 1) * d_head]   # (klen, dh)
        re = remb_ref[n]                                         # (klen, dh)
        rwb = rwb_all[n:n + 1, :]                                # (1, dh)
        rb = rb_all[n:n + 1, :]                                  # (1, klen)

        # Fused AC / BD: one wide MXU push q @ [k | r_emb]^T ...
        kr = jnp.concatenate([k, re], axis=0)                    # (2K, dh)
        qkr = lax.dot_general(q, kr,
                              dimension_numbers=(((1,), (1,)), ((), ())),
                              preferred_element_type=f32)        # (qlen, 2K)
        # ... plus the rank-1 term r_w_bias @ k^T (scale already folded in).
        rwk = lax.dot_general(rwb, k,
                              dimension_numbers=(((1,), (1,)), ((), ())),
                              preferred_element_type=f32)        # (1, klen)
        ac = qkr[:, :klen] + rwk
        bd = rel_shift(qkr[:, klen:] + rb)

        score = ac + bd + bias
        m = jnp.max(score, axis=-1, keepdims=True)
        p = jnp.exp(score - m)
        denom = jnp.sum(p, axis=-1, keepdims=True)
        prob = p * pl.reciprocal(denom, approx=True)
        ctx = jnp.dot(prob.astype(v.dtype), v,
                      preferred_element_type=f32)                # (qlen, dh)
        # Stream per-head result straight into the lane-dense output block.
        out_ref[:, n * d_head:(n + 1) * d_head] = ctx.astype(out_ref.dtype)


def _out_ffn_kernel(ctx_ref, w_ref, ow_ref, ln1g_ref, ln1b_ref,
                    w1_ref, b1_ref, w2_ref, b2_ref, ln2g_ref, ln2b_ref,
                    o_ref, *, eps):
    # attn_out = av @ Wo^T ; x1 = LN(w + attn_out)
    # core     = relu(x1 @ W1^T + b1) @ W2^T + b2 ; out = LN(x1 + core)
    # ctx: (bsz, tq, H) bf16 ; w / out: (tq, bsz, d_model) f32 (module layout)
    f32 = jnp.float32
    bsz = w_ref.shape[1]
    ow = ow_ref[...]
    w1 = w1_ref[...]
    w2 = w2_ref[...]
    ln1g = ln1g_ref[...]
    ln1b = ln1b_ref[...]
    b1 = b1_ref[...]
    b2 = b2_ref[...]
    ln2g = ln2g_ref[...]
    ln2b = ln2b_ref[...]
    for b in range(bsz):                  # static; bsz is small
        av = ctx_ref[b]                                          # (tq, H) bf16
        attn_out = lax.dot_general(av, ow,
                                   dimension_numbers=(((1,), (1,)), ((), ())),
                                   preferred_element_type=f32)
        x = w_ref[:, b, :].astype(f32) + attn_out
        mu = jnp.mean(x, axis=-1, keepdims=True)
        xc = x - mu
        var = jnp.mean(xc * xc, axis=-1, keepdims=True)
        x1 = xc * lax.rsqrt(var + eps) * ln1g + ln1b

        h = lax.dot_general(x1.astype(w1.dtype), w1,
                            dimension_numbers=(((1,), (1,)), ((), ())),
                            preferred_element_type=f32) + b1
        h = jnp.maximum(h, 0.0)
        core = lax.dot_general(h.astype(w2.dtype), w2,
                               dimension_numbers=(((1,), (1,)), ((), ())),
                               preferred_element_type=f32) + b2
        y = x1 + core
        mu2 = jnp.mean(y, axis=-1, keepdims=True)
        yc = y - mu2
        var2 = jnp.mean(yc * yc, axis=-1, keepdims=True)
        o_ref[:, b, :] = yc * lax.rsqrt(var2 + eps) * ln2g + ln2b


# ------------------------------- wrapper ----------------------------------- #

def rel_learnable_decoder_layer(w, r_emb, r_w_bias, r_bias,
                                qkv_w, o_w, ln1_g, ln1_b,
                                ff_w1, ff_b1, ff_w2, ff_b2, ln2_g, ln2_b,
                                attn_mask=None, *, n_head, d_head, eps=1e-5):
    qlen, bsz, d_model = w.shape
    H = n_head * d_head
    d_inner = ff_w1.shape[0]
    klen = qlen                          # no mems / past_key_values
    scale = 1.0 / (d_head ** 0.5)
    f32, bf16 = jnp.float32, jnp.bfloat16
    parallel = pltpu.CompilerParams(dimension_semantics=("parallel",),
                                    vmem_limit_bytes=_VMEM_LIMIT_BYTES)

    w_f32 = w.astype(f32)

    # Fold the attention scale into the q rows of the qkv weight.
    qkv_w_f = qkv_w.astype(f32)
    qkv_w_s = jnp.concatenate([qkv_w_f[:H] * scale, qkv_w_f[H:]],
                              axis=0).astype(bf16)

    # Row-tile target 256 (partial last tile handled by cdiv grid + masked
    # stores); full extent when the sequence is shorter.
    tq = qlen if qlen <= 256 else 256
    grid_q = pl.cdiv(qlen, tq)

    # ---- qkv projection: (qlen, bsz, d_model) -> (bsz, qlen, 3H) ----
    w_heads = pl.pallas_call(
        _qkv_kernel,
        out_shape=jax.ShapeDtypeStruct((bsz, qlen, 3 * H), bf16),
        grid=(grid_q,),
        in_specs=[pl.BlockSpec((tq, bsz, d_model), lambda i: (i, 0, 0)),
                  pl.BlockSpec((3 * H, d_model), lambda i: (0, 0))],
        out_specs=pl.BlockSpec((bsz, tq, 3 * H), lambda i: (0, i, 0)),
        compiler_params=parallel,
    )(w_f32, qkv_w_s)

    # r_emb / r_bias length handling (mirrors the torch branch; shapes static)
    if klen > r_emb.shape[0]:
        pad = klen - r_emb.shape[0]
        r_emb = jnp.concatenate(
            [jnp.broadcast_to(r_emb[0:1], (pad,) + r_emb.shape[1:]), r_emb], 0)
        r_bias = jnp.concatenate(
            [jnp.broadcast_to(r_bias[0:1], (pad,) + r_bias.shape[1:]), r_bias], 0)
    else:
        r_emb = r_emb[-klen:]
        r_bias = r_bias[-klen:]
    r_emb_h = jnp.transpose(r_emb, (1, 0, 2)).astype(bf16)          # (n_head, klen, dh)
    r_w_bias_s = (r_w_bias * scale).astype(bf16)                    # (n_head, dh)
    r_bias_s = (jnp.transpose(r_bias, (1, 0)) * scale).astype(f32)  # (n_head, klen)

    if attn_mask is None:
        mask_bias = jnp.zeros((qlen, klen), bf16)
    else:
        # 2-D mask path of the torch module (additive large-negative bias).
        mask_bias = jnp.where(attn_mask.astype(bool), -1e30, 0.0).astype(bf16)

    # ---- fused attention: AC/BD + rel_shift + mask + softmax + P@V ----
    ctx = pl.pallas_call(
        _attn_kernel,
        out_shape=jax.ShapeDtypeStruct((bsz, qlen, H), bf16),
        grid=(bsz,),
        in_specs=[
            pl.BlockSpec((None, qlen, 3 * H), lambda b: (b, 0, 0)),
            pl.BlockSpec((n_head, klen, d_head), lambda b: (0, 0, 0)),
            pl.BlockSpec((n_head, d_head), lambda b: (0, 0)),
            pl.BlockSpec((n_head, klen), lambda b: (0, 0)),
            pl.BlockSpec((qlen, klen), lambda b: (0, 0)),
        ],
        out_specs=pl.BlockSpec((None, qlen, H), lambda b: (b, 0, 0)),
        compiler_params=parallel,
    )(w_heads, r_emb_h, r_w_bias_s, r_bias_s, mask_bias)

    # ---- out-proj + residual + LN + PositionwiseFF + residual + LN ----
    # Output is produced directly in the module's (qlen, bsz, d_model) layout.
    out = pl.pallas_call(
        functools.partial(_out_ffn_kernel, eps=eps),
        out_shape=jax.ShapeDtypeStruct((qlen, bsz, d_model), f32),
        grid=(grid_q,),
        in_specs=[
            pl.BlockSpec((bsz, tq, H), lambda i: (0, i, 0)),
            pl.BlockSpec((tq, bsz, d_model), lambda i: (i, 0, 0)),
            pl.BlockSpec((d_model, H), lambda i: (0, 0)),
            pl.BlockSpec((1, d_model), lambda i: (0, 0)),
            pl.BlockSpec((1, d_model), lambda i: (0, 0)),
            pl.BlockSpec((d_inner, d_model), lambda i: (0, 0)),
            pl.BlockSpec((1, d_inner), lambda i: (0, 0)),
            pl.BlockSpec((d_model, d_inner), lambda i: (0, 0)),
            pl.BlockSpec((1, d_model), lambda i: (0, 0)),
            pl.BlockSpec((1, d_model), lambda i: (0, 0)),
            pl.BlockSpec((1, d_model), lambda i: (0, 0)),
        ],
        out_specs=pl.BlockSpec((tq, bsz, d_model), lambda i: (i, 0, 0)),
        compiler_params=parallel,
    )(ctx, w_f32, o_w.astype(bf16),
      ln1_g.reshape(1, d_model).astype(f32), ln1_b.reshape(1, d_model).astype(f32),
      ff_w1.astype(bf16), ff_b1.reshape(1, d_inner).astype(f32),
      ff_w2.astype(bf16), ff_b2.reshape(1, d_model).astype(f32),
      ln2_g.reshape(1, d_model).astype(f32), ln2_b.reshape(1, d_model).astype(f32))

    present_key_values = None            # use_cache=False
    return out, present_key_values


# ----------------------- pure-JAX f32 reference (check) -------------------- #

def _rel_shift_ref(x):
    B, N, Q, K = x.shape
    zero_pad = jnp.zeros((B, N, Q, 1), x.dtype)
    x_padded = jnp.concatenate([zero_pad, x], axis=3)
    x_padded = x_padded.reshape(B, N, K + 1, Q)
    return x_padded[:, :, 1:, :].reshape(B, N, Q, K)


def reference_forward(w, r_emb, r_w_bias, r_bias, qkv_w, o_w, ln1_g, ln1_b,
                      ff_w1, ff_b1, ff_w2, ff_b2, ln2_g, ln2_b, attn_mask,
                      n_head, d_head):
    qlen, bsz, d_model = w.shape
    H = n_head * d_head
    w_heads = jnp.einsum('qbm,hm->qbh', w, qkv_w)
    wq, wk, wv = jnp.split(w_heads, 3, axis=-1)
    klen = wk.shape[0]
    wq = wq.reshape(qlen, bsz, n_head, d_head)
    wk = wk.reshape(klen, bsz, n_head, d_head)
    wv = wv.reshape(klen, bsz, n_head, d_head)
    re = r_emb[-klen:]
    rb = r_bias[-klen:].T
    rwq = wq + r_w_bias[None]
    AC = jnp.einsum('ibnd,jbnd->bnij', rwq, wk)
    B_ = jnp.einsum('ibnd,jnd->bnij', wq, re)
    D_ = rb[None, :, None, :]
    BD = _rel_shift_ref(B_ + D_)
    score = (AC + BD) * (1.0 / d_head ** 0.5)
    if attn_mask is not None:
        score = jnp.where(attn_mask[None, None].astype(bool), -jnp.inf, score)
    prob = jax.nn.softmax(score, axis=3)
    av = jnp.einsum('bnij,jbnd->ibnd', prob, wv).reshape(qlen, bsz, H)
    attn_out = jnp.einsum('qbh,mh->qbm', av, o_w)
    x = w + attn_out
    mean = x.mean(-1, keepdims=True)
    var = ((x - mean) ** 2).mean(-1, keepdims=True)
    x1 = (x - mean) / jnp.sqrt(var + 1e-5) * ln1_g + ln1_b
    h = jnp.maximum(jnp.einsum('qbm,im->qbi', x1, ff_w1) + ff_b1, 0.0)
    core = jnp.einsum('qbi,mi->qbm', h, ff_w2) + ff_b2
    y = x1 + core
    mean2 = y.mean(-1, keepdims=True)
    var2 = ((y - mean2) ** 2).mean(-1, keepdims=True)
    return (y - mean2) / jnp.sqrt(var2 + 1e-5) * ln2_g + ln2_b


# ---------------------------------- main ----------------------------------- #

if __name__ == "__main__":
    n_head, d_head, d_model, d_inner = 4, 32, 128, 256
    qlen, bsz = 16, 2

    key = jax.random.PRNGKey(0)
    ks = jax.random.split(key, 12)
    w = jax.random.normal(ks[0], (qlen, bsz, d_model), jnp.float32)
    r_emb = 0.5 * jax.random.normal(ks[1], (qlen, n_head, d_head), jnp.float32)
    r_w_bias = 0.5 * jax.random.normal(ks[2], (n_head, d_head), jnp.float32)
    r_bias = 0.5 * jax.random.normal(ks[3], (qlen, n_head), jnp.float32)
    qkv_w = jax.random.normal(ks[4], (3 * n_head * d_head, d_model),
                              jnp.float32) / d_model ** 0.5
    o_w = jax.random.normal(ks[5], (d_model, n_head * d_head),
                            jnp.float32) / (n_head * d_head) ** 0.5
    ln1_g = 1.0 + 0.1 * jax.random.normal(ks[6], (d_model,), jnp.float32)
    ln1_b = 0.1 * jax.random.normal(ks[7], (d_model,), jnp.float32)
    ff_w1 = jax.random.normal(ks[8], (d_inner, d_model), jnp.float32) / d_model ** 0.5
    ff_b1 = 0.1 * jax.random.normal(ks[9], (d_inner,), jnp.float32)
    ff_w2 = jax.random.normal(ks[10], (d_model, d_inner), jnp.float32) / d_inner ** 0.5
    ff_b2 = 0.1 * jax.random.normal(ks[11], (d_model,), jnp.float32)
    ln2_g = jnp.ones((d_model,), jnp.float32)
    ln2_b = jnp.zeros((d_model,), jnp.float32)

    # causal mask (True = masked), as built by mem-transformer
    ii = jnp.arange(qlen)[:, None]
    jj = jnp.arange(qlen)[None, :]
    attn_mask = jj > ii

    out, present = rel_learnable_decoder_layer(
        w, r_emb, r_w_bias, r_bias, qkv_w, o_w, ln1_g, ln1_b,
        ff_w1, ff_b1, ff_w2, ff_b2, ln2_g, ln2_b, attn_mask,
        n_head=n_head, d_head=d_head)
    out = jax.block_until_ready(out)

    ref = reference_forward(w, r_emb, r_w_bias, r_bias, qkv_w, o_w, ln1_g, ln1_b,
                            ff_w1, ff_b1, ff_w2, ff_b2, ln2_g, ln2_b, attn_mask,
                            n_head, d_head)
    assert out.shape == (qlen, bsz, d_model)
    err = float(jnp.max(jnp.abs(out - ref)))
    # Loose tolerance covers bf16 activations/weights on the MXU path;
    # structural errors (wrong shift / mask / residual) give O(1) deviations.
    assert err < 1e-1, f"max abs error vs f32 reference: {err}"
    print("KERNEL_OK")
</pallas_src>

<mosaic_0001>
module attributes {stable_mosaic.version = 11 : i64} {
  func.func @_qkv_kernel(%arg0: i32, %arg1: memref<16x2x128xf32, #tpu.memory_space<vmem>>, %arg2: memref<384x128xbf16, #tpu.memory_space<vmem>>, %arg3: memref<2x16x384xbf16, #tpu.memory_space<vmem>>) attributes {dimension_semantics = [#tpu.dimension_semantics<parallel>], iteration_bounds = array<i64: 1>, scalar_prefetch = 0 : i64, scratch_operands = 0 : i64, tpu.core_type = #tpu.core_type<tc>, window_params = [{transform_indices = @transform_0, window_bounds = array<i64: 16, 2, 128>}, {pipeline_mode = #tpu.pipeline_mode<synchronous>, transform_indices = @transform_1, window_bounds = array<i64: 384, 128>}, {transform_indices = @transform_2, window_bounds = array<i64: 2, 16, 384>}]} {
    %c0 = arith.constant 0 : index
    %c0_0 = arith.constant 0 : index
    %0 = vector.load %arg2[%c0, %c0_0] : memref<384x128xbf16, #tpu.memory_space<vmem>>, vector<384x128xbf16>
    %c0_1 = arith.constant 0 : index
    %c0_2 = arith.constant 0 : index
    %c0_3 = arith.constant 0 : index
    %1 = vector.load %arg1[%c0_1, %c0_2, %c0_3] : memref<16x2x128xf32, #tpu.memory_space<vmem>>, vector<16x1x128xf32>
    %2 = vector.shape_cast %1 : vector<16x1x128xf32> to vector<16x128xf32>
    %3 = arith.truncf %2 : vector<16x128xf32> to vector<16x128xbf16>
    %cst = arith.constant dense<0.000000e+00> : vector<16x384xf32>
    %4 = tpu.matmul %3, %0, %cst {dimension_numbers = #tpu.dot_dimension_numbers<[1], [1], [0], [0], [0, 0, 1, 0], [], []>} : vector<16x128xbf16>, vector<384x128xbf16>, vector<16x384xf32> -> vector<16x384xf32>
    %5 = arith.truncf %4 : vector<16x384xf32> to vector<16x384xbf16>
    %c0_4 = arith.constant 0 : index
    %c0_5 = arith.constant 0 : index
    %c0_6 = arith.constant 0 : index
    %6 = vector.load %arg3[%c0_4, %c0_5, %c0_6] : memref<2x16x384xbf16, #tpu.memory_space<vmem>>, vector<1x16x384xbf16>
    %7 = vector.shape_cast %6 : vector<1x16x384xbf16> to vector<16x384xbf16>
    %8 = vector.shape_cast %5 : vector<16x384xbf16> to vector<1x16x384xbf16>
    tpu.vector_store %arg3[%c0_4, %c0_5, %c0_6], %8 {strides = array<i32>} : memref<2x16x384xbf16, #tpu.memory_space<vmem>>, vector<1x16x384xbf16>,
    %c0_7 = arith.constant 0 : index
    %c1 = arith.constant 1 : index
    %c0_8 = arith.constant 0 : index
    %9 = vector.load %arg1[%c0_7, %c1, %c0_8] : memref<16x2x128xf32, #tpu.memory_space<vmem>>, vector<16x1x128xf32>
    %10 = vector.shape_cast %9 : vector<16x1x128xf32> to vector<16x128xf32>
    %11 = arith.truncf %10 : vector<16x128xf32> to vector<16x128xbf16>
    %cst_9 = arith.constant dense<0.000000e+00> : vector<16x384xf32>
    %12 = tpu.matmul %11, %0, %cst_9 {dimension_numbers = #tpu.dot_dimension_numbers<[1], [1], [0], [0], [0, 0, 1, 0], [], []>} : vector<16x128xbf16>, vector<384x128xbf16>, vector<16x384xf32> -> vector<16x384xf32>
    %13 = arith.truncf %12 : vector<16x384xf32> to vector<16x384xbf16>
    %c1_10 = arith.constant 1 : index
    %c0_11 = arith.constant 0 : index
    %c0_12 = arith.constant 0 : index
    %14 = vector.load %arg3[%c1_10, %c0_11, %c0_12] : memref<2x16x384xbf16, #tpu.memory_space<vmem>>, vector<1x16x384xbf16>
    %15 = vector.shape_cast %14 : vector<1x16x384xbf16> to vector<16x384xbf16>
    %16 = vector.shape_cast %13 : vector<16x384xbf16> to vector<1x16x384xbf16>
    tpu.vector_store %arg3[%c1_10, %c0_11, %c0_12], %16 {strides = array<i32>} : memref<2x16x384xbf16, #tpu.memory_space<vmem>>, vector<1x16x384xbf16>,
    return
  }
  func.func @transform_0(%arg0: i32) -> (i32, i32, i32) {
    %c0_i32 = arith.constant 0 : i32
    %c0_i32_0 = arith.constant 0 : i32
    %c0_i32_1 = arith.constant 0 : i32
    return %arg0, %c0_i32, %c0_i32_0 : i32, i32, i32
  }
  func.func @transform_1(%arg0: i32) -> (i32, i32) {
    %c0_i32 = arith.constant 0 : i32
    %c0_i32_0 = arith.constant 0 : i32
    %c0_i32_1 = arith.constant 0 : i32
    return %c0_i32, %c0_i32_0 : i32, i32
  }
  func.func @transform_2(%arg0: i32) -> (i32, i32, i32) {
    %c0_i32 = arith.constant 0 : i32
    %c0_i32_0 = arith.constant 0 : i32
    %c0_i32_1 = arith.constant 0 : i32
    return %c0_i32, %arg0, %c0_i32_0 : i32, i32, i32
  }
}

</mosaic_0001>

<llo_original>
// kernel: tpu_custom_call.1
$region0: #{tpu_custom_call.1}
  #allocation0 [shape = 'u32[]', space=smem, size = 0x4, offset = 0x4, fixed_abs, tag = 'smem constant byte address 0x4 - core index']
  #allocation1 [shape = 'u32[144,128]{1,0:T(1,128)}', space=vmem, size = 0x12000, scoped, tag = 'internal scratch']
  %s0 = inlined_call_operand.hbm [shape: f32[16,2,128], index: 0, kind: input, shape index: {}]
  %s1 = inlined_call_operand.hbm [shape: bf16[384,128], index: 1, kind: input, shape index: {}]
  %s2 = inlined_call_operand.hbm [shape: bf16[2,16,384], index: 2, kind: output, shape index: {}]
  %s3 = sld [smem:[#allocation0]]
  $region26: #{tpu_custom_call.1} parent=0
    _
  %s5 = ssub.s32 1, %s3
  %s6 = scalar_select 0, %s5, %s3
  $region1: #{tpu_custom_call.1} parent=0
    #allocation2 [shape = 'u8[16384]{0}', space=vmem, size = 0x4000, scoped, tag = 'input window, operand 0, single buffered']
    #allocation3 [shape = 's32[1]{0}', space=sflag, size = 0x4, scoped, tag = 'scoped memory for tpu_custom_call.1']
    #allocation4 [shape = 's32[1]{0}', space=sflag, size = 0x4, scoped, tag = 'scoped memory for tpu_custom_call.1']
    #allocation5 [shape = 'u8[98304]{0}', space=vmem, size = 0x18000, scoped, tag = 'input window, operand 1, single buffered']
    #allocation6 [shape = 's32[1]{0}', space=sflag, size = 0x4, scoped, tag = 'scoped memory for tpu_custom_call.1']
    #allocation7 [shape = 'u8[24576]{0}', space=vmem, size = 0x6000, scoped, tag = 'output window, operand 0, single buffered']
    %7 = vsyncpa [#allocation3], 0
    %8 = vsyncpa [#allocation6], 0
    %9 = vsyncpa [#allocation4], 0
    // Predicated region
    $region2: #{tpu_custom_call.1} parent=1 // pred_check
      _
    $region3: #{tpu_custom_call.1} parent=1 // pred_check_branch
      %11 = sbr.rel (0) target = $region5
    $region4: #{tpu_custom_call.1} parent=1 // pred_region
      %s13 = ssub.s32 512, 512
      %14 = vsyncadd [#allocation3], %s13
      %s15 = sshll.u32 [#allocation2], 4
      %s16 = int_to_ptr.vmem [resolvable:$true] %s15
      %21 = dma.hbm_to_vmem [thread:$0]  %s0, 512, %s16, [#allocation3], 32, 32, 2
    $region5: #{tpu_custom_call.1} parent=1 // pred_fallthru
      _
    // Predicated region
    $region6: #{tpu_custom_call.1} parent=1 // pred_check
      _
    $region7: #{tpu_custom_call.1} parent=1 // pred_check_branch
      %23 = sbr.rel (0) target = $region9
    $region8: #{tpu_custom_call.1} parent=1 // pred_region
      %s25 = ssub.s32 3072, 3072
      %26 = vsyncadd [#allocation6], %s25
      %s27 = sshll.u32 [#allocation5], 4
      %s28 = int_to_ptr.vmem [resolvable:$true] %s27
      %33 = dma.hbm_to_vmem [thread:$0]  %s1, 3072, %s28, [#allocation6], 64, 64, 4
    $region9: #{tpu_custom_call.1} parent=1 // pred_fallthru
      _
    // Predicated region
    $region10: #{tpu_custom_call.1} parent=1 // pred_check
      _
    $region11: #{tpu_custom_call.1} parent=1 // pred_check_branch
      %35 = sbr.rel (0) target = $region13
    $region12: #{tpu_custom_call.1} parent=1 // pred_region
      %36 = dma.done [#allocation3], 512
    $region13: #{tpu_custom_call.1} parent=1 // pred_fallthru
      _
    // Predicated region
    $region14: #{tpu_custom_call.1} parent=1 // pred_check
      _
    $region15: #{tpu_custom_call.1} parent=1 // pred_check_branch
      %38 = sbr.rel (0) target = $region17
    $region16: #{tpu_custom_call.1} parent=1 // pred_region
      %39 = dma.done [#allocation6], 3072
    $region17: #{tpu_custom_call.1} parent=1 // pred_fallthru
      _
    %v41 = vld [vmem:[#allocation5] sm:$0xf]
    %v42 = vld [vmem:[#allocation5 + $0x4] sm:$0xf]
    %v43 = vld [vmem:[#allocation5 + $0x8] sm:$0xf]
    %v44 = vld [vmem:[#allocation5 + $0xc] sm:$0xf]
    %v45 = vld [vmem:[#allocation5 + $0x10] sm:$0xf]
    %v46 = vld [vmem:[#allocation5 + $0x14] sm:$0xf]
    %v47 = vld [vmem:[#allocation5 + $0x18] sm:$0xf]
    %v48 = vld [vmem:[#allocation5 + $0x1c] sm:$0xf]
    %v49 = vld [vmem:[#allocation5 + $0x20] sm:$0xf]
    %v50 = vld [vmem:[#allocation5 + $0x24] sm:$0xf]
    %v51 = vld [vmem:[#allocation5 + $0x28] sm:$0xf]
    %v52 = vld [vmem:[#allocation5 + $0x2c] sm:$0xf]
    %v53 = vld [vmem:[#allocation5 + $0x30] sm:$0xf]
    %v54 = vld [vmem:[#allocation5 + $0x34] sm:$0xf]
    %v55 = vld [vmem:[#allocation5 + $0x38] sm:$0xf]
    %v56 = vld [vmem:[#allocation5 + $0x3c] sm:$0xf]
    %v57 = vld [vmem:[#allocation5 + $0x40] sm:$0xf]
    %v58 = vld [vmem:[#allocation5 + $0x44] sm:$0xf]
    %v59 = vld [vmem:[#allocation5 + $0x48] sm:$0xf]
    %v60 = vld [vmem:[#allocation5 + $0x4c] sm:$0xf]
    %v61 = vld [vmem:[#allocation5 + $0x50] sm:$0xf]
    %v62 = vld [vmem:[#allocation5 + $0x54] sm:$0xf]
    %v63 = vld [vmem:[#allocation5 + $0x58] sm:$0xf]
    %v64 = vld [vmem:[#allocation5 + $0x5c] sm:$0xf]
    %v65 = vld [vmem:[#allocation5 + $0x60] sm:$0xf]
    %v66 = vld [vmem:[#allocation5 + $0x64] sm:$0xf]
    %v67 = vld [vmem:[#allocation5 + $0x68] sm:$0xf]
    %v68 = vld [vmem:[#allocation5 + $0x6c] sm:$0xf]
    %v69 = vld [vmem:[#allocation5 + $0x70] sm:$0xf]
    %v70 = vld [vmem:[#allocation5 + $0x74] sm:$0xf]
    %v71 = vld [vmem:[#allocation5 + $0x78] sm:$0xf]
    %v72 = vld [vmem:[#allocation5 + $0x7c] sm:$0xf]
    %v73 = vld [vmem:[#allocation5 + $0x80] sm:$0xf]
    %v74 = vld [vmem:[#allocation5 + $0x84] sm:$0xf]
    %v75 = vld [vmem:[#allocation5 + $0x88] sm:$0xf]
    %v76 = vld [vmem:[#allocation5 + $0x8c] sm:$0xf]
    %v77 = vld [vmem:[#allocation5 + $0x90] sm:$0xf]
    %v78 = vld [vmem:[#allocation5 + $0x94] sm:$0xf]
    %v79 = vld [vmem:[#allocation5 + $0x98] sm:$0xf]
    %v80 = vld [vmem:[#allocation5 + $0x9c] sm:$0xf]
    %v81 = vld [vmem:[#allocation5 + $0xa0] sm:$0xf]
    %v82 = vld [vmem:[#allocation5 + $0xa4] sm:$0xf]
    %v83 = vld [vmem:[#allocation5 + $0xa8] sm:$0xf]
    %v84 = vld [vmem:[#allocation5 + $0xac] sm:$0xf]
    %v85 = vld [vmem:[#allocation5 + $0xb0] sm:$0xf]
    %v86 = vld [vmem:[#allocation5 + $0xb4] sm:$0xf]
    %v87 = vld [vmem:[#allocation5 + $0xb8] sm:$0xf]
    %v88 = vld [vmem:[#allocation5 + $0xbc] sm:$0xf]
    %v89 = vld [vmem:[#allocation2] sm:$0x1]
    %v90 = vld [vmem:[#allocation2 + $0x2] sm:$0x1]
    %v91 = vld [vmem:[#allocation2 + $0x4] sm:$0x1]
    %v92 = vld [vmem:[#allocation2 + $0x6] sm:$0x1]
    %v93 = vld [vmem:[#allocation2 + $0x8] sm:$0x1]
    %v94 = vld [vmem:[#allocation2 + $0xa] sm:$0x1]
    %v95 = vld [vmem:[#allocation2 + $0xc] sm:$0x1]
    %v96 = vld [vmem:[#allocation2 + $0xe] sm:$0x1]
    %v97 = vld [vmem:[#allocation2 + $0x10] sm:$0x1]
    %v98 = vld [vmem:[#allocation2 + $0x12] sm:$0x1]
    %v99 = vld [vmem:[#allocation2 + $0x14] sm:$0x1]
    %v100 = vld [vmem:[#allocation2 + $0x16] sm:$0x1]
    %v101 = vld [vmem:[#allocation2 + $0x18] sm:$0x1]
    %v102 = vld [vmem:[#allocation2 + $0x1a] sm:$0x1]
    %v103 = vld [vmem:[#allocation2 + $0x1c] sm:$0x1]
    %v104 = vld [vmem:[#allocation2 + $0x1e] sm:$0x1]
    %v105 = vpack.c.bf16 %v89, %v89
    %v106 = vpack.c.bf16 %v90, %v90
    %v107 = vpack.c.bf16 %v91, %v91
    %v108 = vpack.c.bf16 %v92, %v92
    %v109 = vpack.c.bf16 %v93, %v93
    %v110 = vpack.c.bf16 %v94, %v94
    %v111 = vpack.c.bf16 %v95, %v95
    %v112 = vpack.c.bf16 %v96, %v96
    %v113 = vpack.c.bf16 %v97, %v97
    %v114 = vpack.c.bf16 %v98, %v98
    %v115 = vpack.c.bf16 %v99, %v99
    %v116 = vpack.c.bf16 %v100, %v100
    %v117 = vpack.c.bf16 %v101, %v101
    %v118 = vpack.c.bf16 %v102, %v102
    %v119 = vpack.c.bf16 %v103, %v103
    %v120 = vpack.c.bf16 %v104, %v104
    %v137 = vunpack.c.l.b16 %v105
    %v138 = vunpack.c.l.b16 %v106
    %v139 = vunpack.c.l.b16 %v107
    %v140 = vunpack.c.l.b16 %v108
    %v141 = vunpack.c.l.b16 %v109
    %v142 = vunpack.c.l.b16 %v110
    %v143 = vunpack.c.l.b16 %v111
    %v144 = vunpack.c.l.b16 %v112
    %v145 = vunpack.c.l.b16 %v113
    %v146 = vunpack.c.l.b16 %v114
    %v147 = vunpack.c.l.b16 %v115
    %v148 = vunpack.c.l.b16 %v116
    %v149 = vunpack.c.l.b16 %v117
    %v150 = vunpack.c.l.b16 %v118
    %v151 = vunpack.c.l.b16 %v119
    %v152 = vunpack.c.l.b16 %v120
    %v153 = vrot.slane %v138, 7
    %vm154 = vcmask 1041409
    %v155 = vsel %vm154, %v153, %v137
    %v156 = vrot.slane %v139, 6
    %vm157 = vcmask 1042434
    %v158 = vsel %vm157, %v156, %v155
    %v159 = vrot.slane %v140, 5
    %vm160 = vcmask 1043459
    %v161 = vsel %vm160, %v159, %v158
    %v162 = vrot.slane %v141, 4
    %vm163 = vcmask 1044484
    %v164 = vsel %vm163, %v162, %v161
    %v165 = vrot.slane %v142, 3
    %vm166 = vcmask 1045509
    %v167 = vsel %vm166, %v165, %v164
    %v168 = vrot.slane %v143, 2
    %vm169 = vcmask 1046534
    %v170 = vsel %vm169, %v168, %v167
    %v171 = vrot.slane %v144, 1
    %vm172 = vcmask 1047559
    %v173 = vsel %vm172, %v171, %v170
    %v174 = vrot.slane %v146, 7
    %v175 = vsel %vm154, %v174, %v145
    %v176 = vrot.slane %v147, 6
    %v177 = vsel %vm157, %v176, %v175
    %v178 = vrot.slane %v148, 5
    %v179 = vsel %vm160, %v178, %v177
    %v180 = vrot.slane %v149, 4
    %v181 = vsel %vm163, %v180, %v179
    %v182 = vrot.slane %v150, 3
    %v183 = vsel %vm166, %v182, %v181
    %v184 = vrot.slane %v151, 2
    %v185 = vsel %vm169, %v184, %v183
    %v186 = vrot.slane %v152, 1
    %v187 = vsel %vm172, %v186, %v185
    %v188 = vpack.c.b16 %v187, %v173
    %v238 = vunpack.c.l.b16 %v41
    %v239 = vunpack.c.l.b16 %v42
    %v240 = vunpack.c.l.b16 %v43
    %v241 = vunpack.c.l.b16 %v44
    %v242 = vunpack.c.l.b16 %v45
    %v243 = vunpack.c.l.b16 %v46
    %v244 = vunpack.c.l.b16 %v47
    %v245 = vunpack.c.l.b16 %v48
    %v246 = vunpack.c.l.b16 %v49
    %v247 = vunpack.c.l.b16 %v50
    %v248 = vunpack.c.l.b16 %v51
    %v249 = vunpack.c.l.b16 %v52
    %v250 = vunpack.c.l.b16 %v53
    %v251 = vunpack.c.l.b16 %v54
    %v252 = vunpack.c.l.b16 %v55
    %v253 = vunpack.c.l.b16 %v56
    %v254 = vunpack.c.l.b16 %v57
    %v255 = vunpack.c.l.b16 %v58
    %v256 = vunpack.c.l.b16 %v59
    %v257 = vunpack.c.l.b16 %v60
    %v258 = vunpack.c.l.b16 %v61
    %v259 = vunpack.c.l.b16 %v62
    %v260 = vunpack.c.l.b16 %v63
    %v261 = vunpack.c.l.b16 %v64
    %v262 = vunpack.c.l.b16 %v65
    %v263 = vunpack.c.l.b16 %v66
    %v264 = vunpack.c.l.b16 %v67
    %v265 = vunpack.c.l.b16 %v68
    %v266 = vunpack.c.l.b16 %v69
    %v267 = vunpack.c.l.b16 %v70
    %v268 = vunpack.c.l.b16 %v71
    %v269 = vunpack.c.l.b16 %v72
    %v270 = vunpack.c.l.b16 %v73
    %v271 = vunpack.c.l.b16 %v74
    %v272 = vunpack.c.l.b16 %v75
    %v273 = vunpack.c.l.b16 %v76
    %v274 = vunpack.c.l.b16 %v77
    %v275 = vunpack.c.l.b16 %v78
    %v276 = vunpack.c.l.b16 %v79
    %v277 = vunpack.c.l.b16 %v80
    %v278 = vunpack.c.l.b16 %v81
    %v279 = vunpack.c.l.b16 %v82
    %v280 = vunpack.c.l.b16 %v83
    %v281 = vunpack.c.l.b16 %v84
    %v282 = vunpack.c.l.b16 %v85
    %v283 = vunpack.c.l.b16 %v86
    %v284 = vunpack.c.l.b16 %v87
    %v285 = vunpack.c.l.b16 %v88
    %v286 = vpack.c.b16 %v239, %v238
    %v287 = vpack.c.b16 %v241, %v240
    %v288 = vpack.c.b16 %v243, %v242
    %v289 = vpack.c.b16 %v245, %v244
    %v290 = vpack.c.b16 %v247, %v246
    %v291 = vpack.c.b16 %v249, %v248
    %v292 = vpack.c.b16 %v251, %v250
    %v293 = vpack.c.b16 %v253, %v252
    %v294 = vpack.c.b16 %v255, %v254
    %v295 = vpack.c.b16 %v257, %v256
    %v296 = vpack.c.b16 %v259, %v258
    %v297 = vpack.c.b16 %v261, %v260
    %v298 = vpack.c.b16 %v263, %v262
    %v299 = vpack.c.b16 %v265, %v264
    %v300 = vpack.c.b16 %v267, %v266
    %v301 = vpack.c.b16 %v269, %v268
    %v302 = vpack.c.b16 %v271, %v270
    %v303 = vpack.c.b16 %v273, %v272
    %v304 = vpack.c.b16 %v275, %v274
    %v305 = vpack.c.b16 %v277, %v276
    %v306 = vpack.c.b16 %v279, %v278
    %v307 = vpack.c.b16 %v281, %v280
    %v308 = vpack.c.b16 %v283, %v282
    %v309 = vpack.c.b16 %v285, %v284
    %334 = vmatprep.subr.bf16.mxu0 0
    %335 = vmatpush1.bf16.xpose.msra.mxu0 %v286
    %336 = vmatprep.subr.bf16.mxu0 0
    %337 = vmatpush1.bf16.xpose.msra.mxu0 %v287
    %338 = vmatprep.subr.bf16.mxu0 0
    %339 = vmatpush1.bf16.xpose.msra.mxu0 %v288
    %340 = vmatprep.subr.bf16.mxu0 0
    %341 = vmatpush1.bf16.xpose.msra.mxu0 %v289
    %342 = vmatprep.subr.bf16.mxu0 0
    %343 = vmatpush1.bf16.xpose.msra.mxu0 %v290
    %344 = vmatprep.subr.bf16.mxu0 0
    %345 = vmatpush1.bf16.xpose.msra.mxu0 %v291
    %346 = vmatprep.subr.bf16.mxu0 0
    %347 = vmatpush1.bf16.xpose.msra.mxu0 %v292
    %348 = vmatprep.subr.bf16.mxu0 0
    %349 = vmatpush1.bf16.xpose.msra.mxu0 %v293
    %350 = vmatprep.subr.bf16.mxu0 0
    %351 = vmatpush1.bf16.xpose.msra.mxu0 %v294
    %352 = vmatprep.subr.bf16.mxu0 0
    %353 = vmatpush1.bf16.xpose.msra.mxu0 %v295
    %354 = vmatprep.subr.bf16.mxu0 0
    %355 = vmatpush1.bf16.xpose.msra.mxu0 %v296
    %356 = vmatprep.subr.bf16.mxu0 0
    %357 = vmatpush1.bf16.xpose.msra.mxu0 %v297
    %358 = vmatprep.subr.bf16.mxu0 0
    %359 = vmatpush1.bf16.xpose.msra.mxu0 %v298
    %360 = vmatprep.subr.bf16.mxu0 0
    %361 = vmatpush1.bf16.xpose.msra.mxu0 %v299
    %362 = vmatprep.subr.bf16.mxu0 0
    %363 = vmatpush1.bf16.xpose.msra.mxu0 %v300
    %364 = vmatprep.subr.bf16.mxu0 0
    %365 = vmatpush1.bf16.xpose.msra.mxu0 %v301
    %366 = vmatprep.mubr.bf16.mxu0 0
    %367 = vmatmul.mubr.bf16.gmra.mrb[0].mxu0 %v188
    %v368 = vpop.f32.mrb[0].mxu0
    %v369 = vadd.f32 0.0, %v368
    %v370 = vpop.f32.mrb[0].mxu0
    %v371 = vadd.f32 0.0, %v370
    %v372 = vpop.f32.mrb[0].mxu0
    %v373 = vadd.f32 0.0, %v372
    %v374 = vpop.f32.mrb[0].mxu0
    %v375 = vadd.f32 0.0, %v374
    %376 = vdwg.mxu0
    %377 = vmatprep.subr.bf16.mxu0 0
    %378 = vmatpush1.bf16.xpose.msra.mxu0 %v302
    %379 = vmatprep.subr.bf16.mxu0 0
    %380 = vmatpush1.bf16.xpose.msra.mxu0 %v303
    %381 = vmatprep.subr.bf16.mxu0 0
    %382 = vmatpush1.bf16.xpose.msra.mxu0 %v304
    %383 = vmatprep.subr.bf16.mxu0 0
    %384 = vmatpush1.bf16.xpose.msra.mxu0 %v305
    %385 = vmatprep.subr.bf16.mxu0 0
    %386 = vmatpush1.bf16.xpose.msra.mxu0 %v306
    %387 = vmatprep.subr.bf16.mxu0 0
    %388 = vmatpush1.bf16.xpose.msra.mxu0 %v307
    %389 = vmatprep.subr.bf16.mxu0 0
    %390 = vmatpush1.bf16.xpose.msra.mxu0 %v308
    %391 = vmatprep.subr.bf16.mxu0 0
    %392 = vmatpush1.bf16.xpose.msra.mxu0 %v309
    %393 = vmatprep.subr.bf16.mxu0 0
    %394 = vmatpush1.bf16.xpose.msra.mxu0 0
    %395 = vmatprep.subr.bf16.mxu0 0
    %396 = vmatpush1.bf16.xpose.msra.mxu0 0
    %397 = vmatprep.subr.bf16.mxu0 0
    %398 = vmatpush1.bf16.xpose.msra.mxu0 0
    %399 = vmatprep.subr.bf16.mxu0 0
    %400 = vmatpush1.bf16.xpose.msra.mxu0 0
    %401 = vmatprep.subr.bf16.mxu0 0
    %402 = vmatpush1.bf16.xpose.msra.mxu0 0
    %403 = vmatprep.subr.bf16.mxu0 0
    %404 = vmatpush1.bf16.xpose.msra.mxu0 0
    %405 = vmatprep.subr.bf16.mxu0 0
    %406 = vmatpush1.bf16.xpose.msra.mxu0 0
    %407 = vmatprep.subr.bf16.mxu0 0
    %408 = vmatpush1.bf16.xpose.msra.mxu0 0
    %409 = vmatprep.mubr.bf16.mxu0 0
    %410 = vmatmul.mubr.bf16.gmra.mrb[0].mxu0 %v188
    %v411 = vpop.f32.mrb[0].mxu0
    %v412 = vadd.f32 0.0, %v411
    %v413 = vpop.f32.mrb[0].mxu0
    %v414 = vpop.f32.mrb[0].mxu0
    %v415 = vadd.f32 0.0, %v414
    %v416 = vpop.f32.mrb[0].mxu0
    %417 = vdwg.mxu0
    %v418 = vpack.c.bf16 %v373, %v369
    %v419 = vpack.c.bf16 %v375, %v371
    %v420 = vpack.c.bf16 %v415, %v412
    %v424 = vunpack.c.l.b16 %v418
    %v425 = vunpack.c.l.b16 %v419
    %v426 = vunpack.c.l.b16 %v420
    %v427 = vunpack.c.h.b16 %v418
    %v428 = vunpack.c.h.b16 %v419
    %v429 = vunpack.c.h.b16 %v420
    %v430 = vpack.c.b16 %v425, %v424
    %v431 = vpack.c.b16 %v426, %v426
    %v432 = vpack.c.b16 %v428, %v427
    %v433 = vpack.c.b16 %v429, %v429
    %438 = vst [vmem:[#allocation7] sm:$0xff] %v430
    %439 = vst [vmem:[#allocation7 + $0x8] sm:$0xf] %v431
    %440 = vst [vmem:[#allocation7 + $0xc] sm:$0xff] %v432
    %441 = vst [vmem:[#allocation7 + $0x14] sm:$0xf] %v433
    %v442 = vld [vmem:[#allocation2 + $0x1] sm:$0x1]
    %v443 = vld [vmem:[#allocation2 + $0x3] sm:$0x1]
    %v444 = vld [vmem:[#allocation2 + $0x5] sm:$0x1]
    %v445 = vld [vmem:[#allocation2 + $0x7] sm:$0x1]
    %v446 = vld [vmem:[#allocation2 + $0x9] sm:$0x1]
    %v447 = vld [vmem:[#allocation2 + $0xb] sm:$0x1]
    %v448 = vld [vmem:[#allocation2 + $0xd] sm:$0x1]
    %v449 = vld [vmem:[#allocation2 + $0xf] sm:$0x1]
    %v450 = vld [vmem:[#allocation2 + $0x11] sm:$0x1]
    %v451 = vld [vmem:[#allocation2 + $0x13] sm:$0x1]
    %v452 = vld [vmem:[#allocation2 + $0x15] sm:$0x1]
    %v453 = vld [vmem:[#allocation2 + $0x17] sm:$0x1]
    %v454 = vld [vmem:[#allocation2 + $0x19] sm:$0x1]
    %v455 = vld [vmem:[#allocation2 + $0x1b] sm:$0x1]
    %v456 = vld [vmem:[#allocation2 + $0x1d] sm:$0x1]
    %v457 = vld [vmem:[#allocation2 + $0x1f] sm:$0x1]
    %v458 = vpack.c.bf16 %v442, %v442
    %v459 = vpack.c.bf16 %v443, %v443
    %v460 = vpack.c.bf16 %v444, %v444
    %v461 = vpack.c.bf16 %v445, %v445
    %v462 = vpack.c.bf16 %v446, %v446
    %v463 = vpack.c.bf16 %v447, %v447
    %v464 = vpack.c.bf16 %v448, %v448
    %v465 = vpack.c.bf16 %v449, %v449
    %v466 = vpack.c.bf16 %v450, %v450
    %v467 = vpack.c.bf16 %v451, %v451
    %v468 = vpack.c.bf16 %v452, %v452
    %v469 = vpack.c.bf16 %v453, %v453
    %v470 = vpack.c.bf16 %v454, %v454
    %v471 = vpack.c.bf16 %v455, %v455
    %v472 = vpack.c.bf16 %v456, %v456
    %v473 = vpack.c.bf16 %v457, %v457
    %v490 = vunpack.c.l.b16 %v458
    %v491 = vunpack.c.l.b16 %v459
    %v492 = vunpack.c.l.b16 %v460
    %v493 = vunpack.c.l.b16 %v461
    %v494 = vunpack.c.l.b16 %v462
    %v495 = vunpack.c.l.b16 %v463
    %v496 = vunpack.c.l.b16 %v464
    %v497 = vunpack.c.l.b16 %v465
    %v498 = vunpack.c.l.b16 %v466
    %v499 = vunpack.c.l.b16 %v467
    %v500 = vunpack.c.l.b16 %v468
    %v501 = vunpack.c.l.b16 %v469
    %v502 = vunpack.c.l.b16 %v470
    %v503 = vunpack.c.l.b16 %v471
    %v504 = vunpack.c.l.b16 %v472
    %v505 = vunpack.c.l.b16 %v473
    %v506 = vrot.slane %v491, 7
    %v507 = vsel %vm154, %v506, %v490
    %v508 = vrot.slane %v492, 6
    %v509 = vsel %vm157, %v508, %v507
    %v510 = vrot.slane %v493, 5
    %v511 = vsel %vm160, %v510, %v509
    %v512 = vrot.slane %v494, 4
    %v513 = vsel %vm163, %v512, %v511
    %v514 = vrot.slane %v495, 3
    %v515 = vsel %vm166, %v514, %v513
    %v516 = vrot.slane %v496, 2
    %v517 = vsel %vm169, %v516, %v515
    %v518 = vrot.slane %v497, 1
    %v519 = vsel %vm172, %v518, %v517
    %v520 = vrot.slane %v499, 7
    %v521 = vsel %vm154, %v520, %v498
    %v522 = vrot.slane %v500, 6
    %v523 = vsel %vm157, %v522, %v521
    %v524 = vrot.slane %v501, 5
    %v525 = vsel %vm160, %v524, %v523
    %v526 = vrot.slane %v502, 4
    %v527 = vsel %vm163, %v526, %v525
    %v528 = vrot.slane %v503, 3
    %v529 = vsel %vm166, %v528, %v527
    %v530 = vrot.slane %v504, 2
    %v531 = vsel %vm169, %v530, %v529
    %v532 = vrot.slane %v505, 1
    %v533 = vsel %vm172, %v532, %v531
    %v534 = vpack.c.b16 %v533, %v519
    %536 = vmatprep.subr.bf16.mxu0 0
    %537 = vmatpush1.bf16.xpose.msra.mxu0 %v286
    %538 = vmatprep.subr.bf16.mxu0 0
    %539 = vmatpush1.bf16.xpose.msra.mxu0 %v287
    %540 = vmatprep.subr.bf16.mxu0 0
    %541 = vmatpush1.bf16.xpose.msra.mxu0 %v288
    %542 = vmatprep.subr.bf16.mxu0 0
    %543 = vmatpush1.bf16.xpose.msra.mxu0 %v289
    %544 = vmatprep.subr.bf16.mxu0 0
    %545 = vmatpush1.bf16.xpose.msra.mxu0 %v290
    %546 = vmatprep.subr.bf16.mxu0 0
    %547 = vmatpush1.bf16.xpose.msra.mxu0 %v291
    %548 = vmatprep.subr.bf16.mxu0 0
    %549 = vmatpush1.bf16.xpose.msra.mxu0 %v292
    %550 = vmatprep.subr.bf16.mxu0 0
    %551 = vmatpush1.bf16.xpose.msra.mxu0 %v293
    %552 = vmatprep.subr.bf16.mxu0 0
    %553 = vmatpush1.bf16.xpose.msra.mxu0 %v294
    %554 = vmatprep.subr.bf16.mxu0 0
    %555 = vmatpush1.bf16.xpose.msra.mxu0 %v295
    %556 = vmatprep.subr.bf16.mxu0 0
    %557 = vmatpush1.bf16.xpose.msra.mxu0 %v296
    %558 = vmatprep.subr.bf16.mxu0 0
    %559 = vmatpush1.bf16.xpose.msra.mxu0 %v297
    %560 = vmatprep.subr.bf16.mxu0 0
    %561 = vmatpush1.bf16.xpose.msra.mxu0 %v298
    %562 = vmatprep.subr.bf16.mxu0 0
    %563 = vmatpush1.bf16.xpose.msra.mxu0 %v299
    %564 = vmatprep.subr.bf16.mxu0 0
    %565 = vmatpush1.bf16.xpose.msra.mxu0 %v300
    %566 = vmatprep.subr.bf16.mxu0 0
    %567 = vmatpush1.bf16.xpose.msra.mxu0 %v301
    %568 = vmatprep.mubr.bf16.mxu0 0
    %569 = vmatmul.mubr.bf16.gmra.mrb[0].mxu0 %v534
    %v570 = vpop.f32.mrb[0].mxu0
    %v571 = vadd.f32 0.0, %v570
    %v572 = vpop.f32.mrb[0].mxu0
    %v573 = vadd.f32 0.0, %v572
    %v574 = vpop.f32.mrb[0].mxu0
    %v575 = vadd.f32 0.0, %v574
    %v576 = vpop.f32.mrb[0].mxu0
    %v577 = vadd.f32 0.0, %v576
    %578 = vdwg.mxu0
    %579 = vmatprep.subr.bf16.mxu0 0
    %580 = vmatpush1.bf16.xpose.msra.mxu0 %v302
    %581 = vmatprep.subr.bf16.mxu0 0
    %582 = vmatpush1.bf16.xpose.msra.mxu0 %v303
    %583 = vmatprep.subr.bf16.mxu0 0
    %584 = vmatpush1.bf16.xpose.msra.mxu0 %v304
    %585 = vmatprep.subr.bf16.mxu0 0
    %586 = vmatpush1.bf16.xpose.msra.mxu0 %v305
    %587 = vmatprep.subr.bf16.mxu0 0
    %588 = vmatpush1.bf16.xpose.msra.mxu0 %v306
    %589 = vmatprep.subr.bf16.mxu0 0
    %590 = vmatpush1.bf16.xpose.msra.mxu0 %v307
    %591 = vmatprep.subr.bf16.mxu0 0
    %592 = vmatpush1.bf16.xpose.msra.mxu0 %v308
    %593 = vmatprep.subr.bf16.mxu0 0
    %594 = vmatpush1.bf16.xpose.msra.mxu0 %v309
    %595 = vmatprep.subr.bf16.mxu0 0
    %596 = vmatpush1.bf16.xpose.msra.mxu0 0
    %597 = vmatprep.subr.bf16.mxu0 0
    %598 = vmatpush1.bf16.xpose.msra.mxu0 0
    %599 = vmatprep.subr.bf16.mxu0 0
    %600 = vmatpush1.bf16.xpose.msra.mxu0 0
    %601 = vmatprep.subr.bf16.mxu0 0
    %602 = vmatpush1.bf16.xpose.msra.mxu0 0
    %603 = vmatprep.subr.bf16.mxu0 0
    %604 = vmatpush1.bf16.xpose.msra.mxu0 0
    %605 = vmatprep.subr.bf16.mxu0 0
    %606 = vmatpush1.bf16.xpose.msra.mxu0 0
    %607 = vmatprep.subr.bf16.mxu0 0
    %608 = vmatpush1.bf16.xpose.msra.mxu0 0
    %609 = vmatprep.subr.bf16.mxu0 0
    %610 = vmatpush1.bf16.xpose.msra.mxu0 0
    %611 = vmatprep.mubr.bf16.mxu0 0
    %612 = vmatmul.mubr.bf16.gmra.mrb[0].mxu0 %v534
    %v613 = vpop.f32.mrb[0].mxu0
    %v614 = vadd.f32 0.0, %v613
    %v615 = vpop.f32.mrb[0].mxu0
    %v616 = vpop.f32.mrb[0].mxu0
    %v617 = vadd.f32 0.0, %v616
    %v618 = vpop.f32.mrb[0].mxu0
    %619 = vdwg.mxu0
    %v620 = vpack.c.bf16 %v575, %v571
    %v621 = vpack.c.bf16 %v577, %v573
    %v622 = vpack.c.bf16 %v617, %v614
    %v626 = vunpack.c.l.b16 %v620
    %v627 = vunpack.c.l.b16 %v621
    %v628 = vunpack.c.l.b16 %v622
    %v629 = vunpack.c.h.b16 %v620
    %v630 = vunpack.c.h.b16 %v621
    %v631 = vunpack.c.h.b16 %v622
    %v632 = vpack.c.b16 %v627, %v626
    %v633 = vpack.c.b16 %v628, %v628
    %v634 = vpack.c.b16 %v630, %v629
    %v635 = vpack.c.b16 %v631, %v631
    %s640 = scalar_lea.vmem [#allocation7], 24
    %641 = vst [vmem:[%s640] sm:$0xff] %v632
    %642 = vst [vmem:[%s640 + $0x8] sm:$0xf] %v633
    %643 = vst [vmem:[%s640 + $0xc] sm:$0xff] %v634
    %644 = vst [vmem:[%s640 + $0x14] sm:$0xf] %v635
    // Predicated region
    $region18: #{tpu_custom_call.1} parent=1 // pred_check
      _
    $region19: #{tpu_custom_call.1} parent=1 // pred_check_branch
      %646 = sbr.rel (0) target = $region21
    $region20: #{tpu_custom_call.1} parent=1 // pred_region
      %s648 = ssub.s32 768, 768
      %649 = vsyncadd [#allocation4], %s648
      %s650 = sshll.u32 [#allocation7], 4
      %s651 = int_to_ptr.vmem [resolvable:$true] %s650
      %656 = dma.vmem_to_hbm [thread:$0]  %s651, 768, %s2, [#allocation4], 192, 192, 12
    $region21: #{tpu_custom_call.1} parent=1 // pred_fallthru
      _
    // Predicated region
    $region22: #{tpu_custom_call.1} parent=1 // pred_check
      _
    $region23: #{tpu_custom_call.1} parent=1 // pred_check_branch
      %658 = sbr.rel (0) target = $region25
    $region24: #{tpu_custom_call.1} parent=1 // pred_region
      %659 = dma.done [#allocation4], 768
    $region25: #{tpu_custom_call.1} parent=1 // pred_fallthru
      _
    %660 = vsyncpa [#allocation3], 1
    %661 = vsyncpa [#allocation6], 1
    %662 = vsyncpa [#allocation4], 1

</llo_original>
